<compile_context>
chip_gen: v7x
topology: tpu7x:2x2x1
jax: 0.10.0
libtpu: 0.0.40
codegen_flags: <defaults>
</compile_context>

<pallas_src>
import jax
import jax.numpy as jnp
from jax.experimental import pallas as pl
from jax.experimental.pallas import tpu as pltpu


def _basic_block_kernel(x_ref, w1_ref, w2_ref, b1_ref, b2_ref, out_ref,
                        xpad1_ref, xpad2_ref):
    """conv1 + bn1 + relu + conv2 + bn2 for a block of images, entirely in VMEM.

    x_ref    : (B, H, W*Cin)        bf16  lane-dense input slab block
    w1_ref   : (3, W*Cin,  W*Cout)  bf16  band weights for conv1 (BN1 scale folded)
    w2_ref   : (3, W*Cout, W*Cout)  bf16  band weights for conv2 (BN2 scale folded)
    b1_ref   : (1, W*Cout)          f32   folded BN1 bias row
    b2_ref   : (1, W*Cout)          f32   folded BN2 bias row
    out_ref  : (B, H, W*Cout)       bf16  lane-dense output slab block
    xpad*_ref: (B*(H+2), W*C) f32 scratch: stacked H-halo-padded activations
               (the W halo is folded into the band matrices).
    """
    B, H, WC_out = out_ref.shape
    Hp = H + 2
    Mp = B * Hp          # stacked padded rows
    M = Mp - 2           # stacked matmul M dimension

    # Zero ONLY the halo rows (interior rows are fully overwritten below).
    # Unconditional (cheap single-row stores) rather than pl.when(pid == 0),
    # so per-core scratch is valid even when the grid is core-sharded.
    zrow_in = jnp.zeros((1, xpad1_ref.shape[1]), xpad1_ref.dtype)
    zrow_out = jnp.zeros((1, xpad2_ref.shape[1]), xpad2_ref.dtype)
    for b in range(B):
        xpad1_ref[b * Hp:b * Hp + 1, :] = zrow_in              # top halo
        xpad1_ref[b * Hp + H + 1:b * Hp + H + 2, :] = zrow_in  # bottom halo
    xpad2_ref[0:1, :] = zrow_out
    xpad2_ref[Mp - 1:Mp, :] = zrow_out

    # --- conv1 staging: copy each image into its halo-padded slot (VMEM only).
    for b in range(B):
        xpad1_ref[b * Hp + 1:b * Hp + 1 + H, :] = x_ref[b].astype(xpad1_ref.dtype)

    # --- conv1: 3 stacked band matmuls, bf16 MXU operands, f32 accumulation.
    # BN1 scale is pre-folded into w1's output columns; only +bias/ReLU remain.
    acc = jnp.zeros((M, WC_out), jnp.float32)
    for dy in range(3):
        acc += jnp.dot(xpad1_ref[dy:dy + M, :].astype(jnp.bfloat16),
                       w1_ref[dy], preferred_element_type=jnp.float32)

    # Rows falling between images in the stacked layout are junk; force them to
    # zero so they land exactly on xpad2's inter-image halo rows.
    row = jax.lax.broadcasted_iota(jnp.int32, (M, WC_out), 0)
    valid = (row % Hp) < H
    y1 = jnp.where(valid, jnp.maximum(acc + b1_ref[...], 0.0), 0.0)

    # --- conv2 staging: the intermediate activation never leaves VMEM. ---
    xpad2_ref[1:1 + M, :] = y1

    acc = jnp.zeros((M, WC_out), jnp.float32)
    for dy in range(3):
        acc += jnp.dot(xpad2_ref[dy:dy + M, :].astype(jnp.bfloat16),
                       w2_ref[dy], preferred_element_type=jnp.float32)

    # BN2 bias epilogue; bf16 lane-dense output, junk rows are never stored.
    y2 = acc + b2_ref[...]
    for b in range(B):
        out_ref[b] = y2[b * Hp:b * Hp + H, :].astype(out_ref.dtype)


def _band_weights(w_hwio, width):
    """Fold the 3 dx taps (and the W zero-padding) of a 3x3, pad=1 conv into
    block-banded matrices M[dy] of shape (W*Cin, W*Cout) such that
        y_rows = sum_dy  xpadH[dy:dy+H, :] @ M[dy]
    where xpadH is the H-halo-padded (H+2, W*Cin) activation slab."""
    kh, kw, cin, cout = w_hwio.shape
    assert (kh, kw) == (3, 3), "only 3x3 kernels supported"
    wp = jnp.arange(width)   # source column
    wo = jnp.arange(width)   # output column
    dx = jnp.arange(kw)
    # sel[dx, wp, wo] = 1 iff source col wp == output col wo + dx - 1
    sel = (wp[None, :, None] == (wo[None, None, :] + dx[:, None, None] - 1))
    sel = sel.astype(w_hwio.dtype)
    m = jnp.einsum("xpw,yxio->ypiwo", sel, w_hwio)        # (3, W, Cin, W, Cout)
    return m.reshape(kh, width * cin, width * cout)


def prepare_basic_block_params(params, width, *, eps=1e-5):
    """One-time weight prep (hoisted out of the per-call path; cache this).

    Folds eval-mode BN scale into the conv output channels BEFORE the band
    expansion / bf16 cast, so the kernel epilogue is only a bias add."""
    cout = params["w1"].shape[-1]

    def fold(g, b, m, v):
        inv = 1.0 / jnp.sqrt(v.astype(jnp.float32) + eps)
        scale = g.astype(jnp.float32) * inv
        bias = b.astype(jnp.float32) - m.astype(jnp.float32) * scale
        return scale, bias

    s1, o1 = fold(params["g1"], params["b1"], params["m1"], params["v1"])
    s2, o2 = fold(params["g2"], params["b2"], params["m2"], params["v2"])

    w1 = params["w1"].astype(jnp.float32) * s1[None, None, None, :]
    w2 = params["w2"].astype(jnp.float32) * s2[None, None, None, :]
    return {
        "band1": _band_weights(w1, width).astype(jnp.bfloat16),
        "band2": _band_weights(w2, width).astype(jnp.bfloat16),
        "bias1": jnp.tile(o1, width).reshape(1, width * cout).astype(jnp.float32),
        "bias2": jnp.tile(o2, width).reshape(1, width * cout).astype(jnp.float32),
    }


def _pick_block_n(n, h, max_rows=512):
    """Largest divisor of n whose stacked padded-row count stays <= max_rows
    (keeps M near/above the 128/256-row MXU while bounding scratch VMEM)."""
    best = 1
    for d in range(1, n + 1):
        if n % d == 0 and d * (h + 2) <= max_rows:
            best = d
    return best


def basic_block_forward(x_nchw, prep, *, block_n=None):
    """BasicBlock.forward (stride 1): conv1->bn1->relu->conv2->bn2.

    NCHW f32 in, NCHW bf16 out (downstream blocks re-cast to bf16 anyway)."""
    N, Cin, H, W = x_nchw.shape
    WC_in = W * Cin
    WC_out = prep["band1"].shape[-1]
    Cout = WC_out // W
    assert prep["band1"].shape == (3, WC_in, WC_out)

    # NCHW -> NHWC -> lane-dense (N, H, W*Cin) bf16 slab.
    x = jnp.transpose(x_nchw, (0, 2, 3, 1)).reshape(N, H, WC_in)
    x = x.astype(jnp.bfloat16)

    if block_n is None:
        block_n = _pick_block_n(N, H)
    assert N % block_n == 0
    steps = N // block_n
    m_rows = block_n * (H + 2) - 2

    flops = 2 * 3 * steps * m_rows * (WC_in * WC_out + WC_out * WC_out)
    bytes_accessed = (x.size * 2 + prep["band1"].size * 2 + prep["band2"].size * 2
                      + 2 * WC_out * 4 + N * H * WC_out * 2)

    out = pl.pallas_call(
        _basic_block_kernel,
        out_shape=jax.ShapeDtypeStruct((N, H, WC_out), jnp.bfloat16),
        grid_spec=pltpu.PrefetchScalarGridSpec(
            num_scalar_prefetch=0,
            grid=(steps,),
            in_specs=[
                pl.BlockSpec((block_n, H, WC_in), lambda n: (n, 0, 0)),   # x slab block
                pl.BlockSpec((3, WC_in, WC_out), lambda n: (0, 0, 0)),    # conv1 band W (resident)
                pl.BlockSpec((3, WC_out, WC_out), lambda n: (0, 0, 0)),   # conv2 band W (resident)
                pl.BlockSpec((1, WC_out), lambda n: (0, 0)),              # bn1 folded bias
                pl.BlockSpec((1, WC_out), lambda n: (0, 0)),              # bn2 folded bias
            ],
            out_specs=pl.BlockSpec((block_n, H, WC_out), lambda n: (n, 0, 0)),
            scratch_shapes=[
                pltpu.VMEM((block_n * (H + 2), WC_in), jnp.float32),   # conv1 stacked padded slab
                pltpu.VMEM((block_n * (H + 2), WC_out), jnp.float32),  # conv2 stacked padded slab
            ]),
        compiler_params=pltpu.CompilerParams(
            dimension_semantics=("parallel",),          # batch-block axis
            vmem_limit_bytes=32 * 1024 * 1024),
        cost_estimate=pl.CostEstimate(flops=flops, transcendentals=0,
                                      bytes_accessed=bytes_accessed),
    )(x, prep["band1"], prep["band2"], prep["bias1"], prep["bias2"])

    # (N, H, W*Cout) -> NCHW
    return jnp.transpose(out.reshape(N, H, W, Cout), (0, 3, 1, 2))


def _reference_forward(x_nchw, params, eps=1e-5):
    """Pure-JAX reference (lax.conv; same bf16-operand / f32-accum recipe)."""
    def conv_bn(x, w, g, b, m, v, relu):
        y = jax.lax.conv_general_dilated(
            x.astype(jnp.bfloat16), w.astype(jnp.bfloat16),
            window_strides=(1, 1), padding=((1, 1), (1, 1)),
            dimension_numbers=("NHWC", "HWIO", "NHWC"),
            preferred_element_type=jnp.float32)
        y = (y - m) / jnp.sqrt(v + eps) * g + b
        return jnp.maximum(y, 0.0) if relu else y

    x = jnp.transpose(x_nchw, (0, 2, 3, 1)).astype(jnp.float32)
    y = conv_bn(x, params["w1"], params["g1"], params["b1"],
                params["m1"], params["v1"], True)
    y = conv_bn(y, params["w2"], params["g2"], params["b2"],
                params["m2"], params["v2"], False)
    return jnp.transpose(y, (0, 3, 1, 2))


if __name__ == "__main__":
    # Shapes consistent with BasicBlock(in_=4, out=8): x is NCHW (2, 4, 16, 16).
    N, Cin, Cout, H, W = 2, 4, 8, 16, 16
    key = jax.random.PRNGKey(0)
    k1, k2, k3, k4, kx = jax.random.split(key, 5)

    params = {
        # Conv weights in HWIO layout (3, 3, Cin, Cout); no bias (bias=False).
        "w1": 0.1 * jax.random.normal(k1, (3, 3, Cin, Cout), jnp.float32),
        "w2": 0.1 * jax.random.normal(k2, (3, 3, Cout, Cout), jnp.float32),
        # BN1 affine params + default running stats (eval-mode semantics).
        "g1": 1.0 + 0.1 * jax.random.normal(k3, (Cout,), jnp.float32),
        "b1": 0.1 * jax.random.normal(k3, (Cout,), jnp.float32),
        "m1": jnp.zeros((Cout,), jnp.float32),
        "v1": jnp.ones((Cout,), jnp.float32),
        # BN2.
        "g2": 1.0 + 0.1 * jax.random.normal(k4, (Cout,), jnp.float32),
        "b2": 0.1 * jax.random.normal(k4, (Cout,), jnp.float32),
        "m2": jnp.zeros((Cout,), jnp.float32),
        "v2": jnp.ones((Cout,), jnp.float32),
    }

    x = jax.random.normal(kx, (N, Cin, H, W), jnp.float32)

    # One-time weight prep (cache alongside the params in a real model).
    prep = prepare_basic_block_params(params, W)

    out = jax.block_until_ready(basic_block_forward(x, prep))
    ref = _reference_forward(x, params)

    assert out.shape == (N, Cout, H, W), out.shape
    assert out.dtype == jnp.bfloat16, out.dtype
    assert jnp.allclose(out.astype(jnp.float32), ref, atol=2e-2, rtol=2e-2), \
        "mismatch vs reference"

    print("KERNEL_OK")
</pallas_src>

<mosaic_0001>
module attributes {stable_mosaic.version = 11 : i64} {
  func.func @_basic_block_kernel(%arg0: i32, %arg1: memref<2x16x64xbf16, #tpu.memory_space<vmem>>, %arg2: memref<3x64x128xbf16, #tpu.memory_space<vmem>>, %arg3: memref<3x128x128xbf16, #tpu.memory_space<vmem>>, %arg4: memref<1x128xf32, #tpu.memory_space<vmem>>, %arg5: memref<1x128xf32, #tpu.memory_space<vmem>>, %arg6: memref<2x16x128xbf16, #tpu.memory_space<vmem>>, %arg7: memref<36x64xf32, #tpu.memory_space<vmem>>, %arg8: memref<36x128xf32, #tpu.memory_space<vmem>>) attributes {dimension_semantics = [#tpu.dimension_semantics<parallel>], iteration_bounds = array<i64: 1>, scalar_prefetch = 0 : i64, scratch_operands = 2 : i64, tpu.core_type = #tpu.core_type<tc>, window_params = [{transform_indices = @transform_0, window_bounds = array<i64: 2, 16, 64>}, {pipeline_mode = #tpu.pipeline_mode<synchronous>, transform_indices = @transform_1, window_bounds = array<i64: 3, 64, 128>}, {pipeline_mode = #tpu.pipeline_mode<synchronous>, transform_indices = @transform_2, window_bounds = array<i64: 3, 128, 128>}, {pipeline_mode = #tpu.pipeline_mode<synchronous>, transform_indices = @transform_3, window_bounds = array<i64: 1, 128>}, {pipeline_mode = #tpu.pipeline_mode<synchronous>, transform_indices = @transform_4, window_bounds = array<i64: 1, 128>}, {transform_indices = @transform_5, window_bounds = array<i64: 2, 16, 128>}]} {
    %cst = arith.constant 0.000000e+00 : f32
    %0 = vector.broadcast %cst : f32 to vector<1x64xf32>
    %cst_0 = arith.constant 0.000000e+00 : f32
    %1 = vector.broadcast %cst_0 : f32 to vector<1x128xf32>
    %c0 = arith.constant 0 : index
    %c0_1 = arith.constant 0 : index
    %2 = vector.load %arg7[%c0, %c0_1] : memref<36x64xf32, #tpu.memory_space<vmem>>, vector<1x64xf32>
    tpu.vector_store %arg7[%c0, %c0_1], %0 {strides = array<i32>} : memref<36x64xf32, #tpu.memory_space<vmem>>, vector<1x64xf32>,
    %c17 = arith.constant 17 : index
    %c0_2 = arith.constant 0 : index
    %3 = vector.load %arg7[%c17, %c0_2] : memref<36x64xf32, #tpu.memory_space<vmem>>, vector<1x64xf32>
    tpu.vector_store %arg7[%c17, %c0_2], %0 {strides = array<i32>} : memref<36x64xf32, #tpu.memory_space<vmem>>, vector<1x64xf32>,
    %c18 = arith.constant 18 : index
    %c0_3 = arith.constant 0 : index
    %4 = vector.load %arg7[%c18, %c0_3] : memref<36x64xf32, #tpu.memory_space<vmem>>, vector<1x64xf32>
    tpu.vector_store %arg7[%c18, %c0_3], %0 {strides = array<i32>} : memref<36x64xf32, #tpu.memory_space<vmem>>, vector<1x64xf32>,
    %c35 = arith.constant 35 : index
    %c0_4 = arith.constant 0 : index
    %5 = vector.load %arg7[%c35, %c0_4] : memref<36x64xf32, #tpu.memory_space<vmem>>, vector<1x64xf32>
    tpu.vector_store %arg7[%c35, %c0_4], %0 {strides = array<i32>} : memref<36x64xf32, #tpu.memory_space<vmem>>, vector<1x64xf32>,
    %c0_5 = arith.constant 0 : index
    %c0_6 = arith.constant 0 : index
    %6 = vector.load %arg8[%c0_5, %c0_6] : memref<36x128xf32, #tpu.memory_space<vmem>>, vector<1x128xf32>
    tpu.vector_store %arg8[%c0_5, %c0_6], %1 {strides = array<i32>} : memref<36x128xf32, #tpu.memory_space<vmem>>, vector<1x128xf32>,
    %c35_7 = arith.constant 35 : index
    %c0_8 = arith.constant 0 : index
    %7 = vector.load %arg8[%c35_7, %c0_8] : memref<36x128xf32, #tpu.memory_space<vmem>>, vector<1x128xf32>
    tpu.vector_store %arg8[%c35_7, %c0_8], %1 {strides = array<i32>} : memref<36x128xf32, #tpu.memory_space<vmem>>, vector<1x128xf32>,
    %c0_9 = arith.constant 0 : index
    %c0_10 = arith.constant 0 : index
    %c0_11 = arith.constant 0 : index
    %8 = vector.load %arg1[%c0_9, %c0_10, %c0_11] : memref<2x16x64xbf16, #tpu.memory_space<vmem>>, vector<1x16x64xbf16>
    %9 = vector.shape_cast %8 : vector<1x16x64xbf16> to vector<16x64xbf16>
    %10 = arith.extf %9 : vector<16x64xbf16> to vector<16x64xf32>
    %c1 = arith.constant 1 : index
    %c0_12 = arith.constant 0 : index
    %11 = vector.load %arg7[%c1, %c0_12] : memref<36x64xf32, #tpu.memory_space<vmem>>, vector<16x64xf32>
    tpu.vector_store %arg7[%c1, %c0_12], %10 {strides = array<i32>} : memref<36x64xf32, #tpu.memory_space<vmem>>, vector<16x64xf32>,
    %c1_13 = arith.constant 1 : index
    %c0_14 = arith.constant 0 : index
    %c0_15 = arith.constant 0 : index
    %12 = vector.load %arg1[%c1_13, %c0_14, %c0_15] : memref<2x16x64xbf16, #tpu.memory_space<vmem>>, vector<1x16x64xbf16>
    %13 = vector.shape_cast %12 : vector<1x16x64xbf16> to vector<16x64xbf16>
    %14 = arith.extf %13 : vector<16x64xbf16> to vector<16x64xf32>
    %c19 = arith.constant 19 : index
    %c0_16 = arith.constant 0 : index
    %15 = vector.load %arg7[%c19, %c0_16] : memref<36x64xf32, #tpu.memory_space<vmem>>, vector<16x64xf32>
    tpu.vector_store %arg7[%c19, %c0_16], %14 {strides = array<i32>} : memref<36x64xf32, #tpu.memory_space<vmem>>, vector<16x64xf32>,
    %cst_17 = arith.constant 0.000000e+00 : f32
    %16 = vector.broadcast %cst_17 : f32 to vector<34x128xf32>
    %c0_18 = arith.constant 0 : index
    %c0_19 = arith.constant 0 : index
    %17 = vector.load %arg7[%c0_18, %c0_19] : memref<36x64xf32, #tpu.memory_space<vmem>>, vector<34x64xf32>
    %18 = arith.truncf %17 : vector<34x64xf32> to vector<34x64xbf16>
    %c0_20 = arith.constant 0 : index
    %c0_21 = arith.constant 0 : index
    %c0_22 = arith.constant 0 : index
    %19 = vector.load %arg2[%c0_20, %c0_21, %c0_22] : memref<3x64x128xbf16, #tpu.memory_space<vmem>>, vector<1x64x128xbf16>
    %20 = vector.shape_cast %19 : vector<1x64x128xbf16> to vector<64x128xbf16>
    %cst_23 = arith.constant dense<0.000000e+00> : vector<34x128xf32>
    %21 = tpu.matmul %18, %20, %cst_23 {dimension_numbers = #tpu.dot_dimension_numbers<[1], [0], [0], [1], [0, 0, 1, 1], [], []>} : vector<34x64xbf16>, vector<64x128xbf16>, vector<34x128xf32> -> vector<34x128xf32>
    %22 = arith.addf %16, %21 : vector<34x128xf32>
    %c1_24 = arith.constant 1 : index
    %c0_25 = arith.constant 0 : index
    %23 = vector.load %arg7[%c1_24, %c0_25] : memref<36x64xf32, #tpu.memory_space<vmem>>, vector<34x64xf32>
    %24 = arith.truncf %23 : vector<34x64xf32> to vector<34x64xbf16>
    %c1_26 = arith.constant 1 : index
    %c0_27 = arith.constant 0 : index
    %c0_28 = arith.constant 0 : index
    %25 = vector.load %arg2[%c1_26, %c0_27, %c0_28] : memref<3x64x128xbf16, #tpu.memory_space<vmem>>, vector<1x64x128xbf16>
    %26 = vector.shape_cast %25 : vector<1x64x128xbf16> to vector<64x128xbf16>
    %cst_29 = arith.constant dense<0.000000e+00> : vector<34x128xf32>
    %27 = tpu.matmul %24, %26, %cst_29 {dimension_numbers = #tpu.dot_dimension_numbers<[1], [0], [0], [1], [0, 0, 1, 1], [], []>} : vector<34x64xbf16>, vector<64x128xbf16>, vector<34x128xf32> -> vector<34x128xf32>
    %28 = arith.addf %22, %27 : vector<34x128xf32>
    %c2 = arith.constant 2 : index
    %c0_30 = arith.constant 0 : index
    %29 = vector.load %arg7[%c2, %c0_30] : memref<36x64xf32, #tpu.memory_space<vmem>>, vector<34x64xf32>
    %30 = arith.truncf %29 : vector<34x64xf32> to vector<34x64xbf16>
    %c2_31 = arith.constant 2 : index
    %c0_32 = arith.constant 0 : index
    %c0_33 = arith.constant 0 : index
    %31 = vector.load %arg2[%c2_31, %c0_32, %c0_33] : memref<3x64x128xbf16, #tpu.memory_space<vmem>>, vector<1x64x128xbf16>
    %32 = vector.shape_cast %31 : vector<1x64x128xbf16> to vector<64x128xbf16>
    %cst_34 = arith.constant dense<0.000000e+00> : vector<34x128xf32>
    %33 = tpu.matmul %30, %32, %cst_34 {dimension_numbers = #tpu.dot_dimension_numbers<[1], [0], [0], [1], [0, 0, 1, 1], [], []>} : vector<34x64xbf16>, vector<64x128xbf16>, vector<34x128xf32> -> vector<34x128xf32>
    %34 = arith.addf %28, %33 : vector<34x128xf32>
    %35 = tpu.iota {dimensions = array<i32: 0>} : vector<34x128xi32>
    %c18_i32 = arith.constant 18 : i32
    %c0_i32 = arith.constant 0 : i32
    %36 = arith.cmpi eq, %c18_i32, %c0_i32 : i32
    %c1_i32 = arith.constant 1 : i32
    %37 = arith.select %36, %c1_i32, %c18_i32 : i32
    %38 = vector.broadcast %37 : i32 to vector<34x128xi32>
    %39 = arith.remsi %35, %38 : vector<34x128xi32>
    %c0_i32_35 = arith.constant 0 : i32
    %40 = vector.broadcast %c0_i32_35 : i32 to vector<34x128xi32>
    %41 = arith.cmpi ne, %39, %40 : vector<34x128xi32>
    %c0_i32_36 = arith.constant 0 : i32
    %42 = vector.broadcast %c0_i32_36 : i32 to vector<34x128xi32>
    %43 = arith.cmpi slt, %39, %42 : vector<34x128xi32>
    %c0_i32_37 = arith.constant 0 : i32
    %44 = arith.cmpi slt, %37, %c0_i32_37 : i32
    %45 = vector.broadcast %44 : i1 to vector<34x128xi1>
    %46 = vector.broadcast %45 : vector<34x128xi1> to vector<34x128xi1>
    %47 = arith.xori %43, %46 : vector<34x128xi1>
    %48 = arith.andi %47, %41 : vector<34x128xi1>
    %49 = vector.broadcast %37 : i32 to vector<34x128xi32>
    %50 = arith.addi %39, %49 : vector<34x128xi32>
    %51 = arith.select %48, %50, %39 : vector<34x128xi1>, vector<34x128xi32>
    %c16_i32 = arith.constant 16 : i32
    %52 = vector.broadcast %c16_i32 : i32 to vector<34x128xi32>
    %53 = arith.cmpi slt, %51, %52 : vector<34x128xi32>
    %c0_38 = arith.constant 0 : index
    %c0_39 = arith.constant 0 : index
    %54 = vector.load %arg4[%c0_38, %c0_39] : memref<1x128xf32, #tpu.memory_space<vmem>>, vector<1x128xf32>
    %55 = vector.broadcast %54 : vector<1x128xf32> to vector<34x128xf32>
    %56 = arith.addf %34, %55 : vector<34x128xf32>
    %cst_40 = arith.constant 0.000000e+00 : f32
    %57 = vector.broadcast %cst_40 : f32 to vector<34x128xf32>
    %58 = arith.maximumf %56, %57 : vector<34x128xf32>
    %cst_41 = arith.constant 0.000000e+00 : f32
    %59 = vector.broadcast %cst_41 : f32 to vector<34x128xf32>
    %60 = arith.select %53, %58, %59 : vector<34x128xi1>, vector<34x128xf32>
    %c1_42 = arith.constant 1 : index
    %c0_43 = arith.constant 0 : index
    %61 = vector.load %arg8[%c1_42, %c0_43] : memref<36x128xf32, #tpu.memory_space<vmem>>, vector<34x128xf32>
    tpu.vector_store %arg8[%c1_42, %c0_43], %60 {strides = array<i32>} : memref<36x128xf32, #tpu.memory_space<vmem>>, vector<34x128xf32>,
    %cst_44 = arith.constant 0.000000e+00 : f32
    %62 = vector.broadcast %cst_44 : f32 to vector<34x128xf32>
    %c0_45 = arith.constant 0 : index
    %c0_46 = arith.constant 0 : index
    %63 = vector.load %arg8[%c0_45, %c0_46] : memref<36x128xf32, #tpu.memory_space<vmem>>, vector<34x128xf32>
    %64 = arith.truncf %63 : vector<34x128xf32> to vector<34x128xbf16>
    %c0_47 = arith.constant 0 : index
    %c0_48 = arith.constant 0 : index
    %c0_49 = arith.constant 0 : index
    %65 = vector.load %arg3[%c0_47, %c0_48, %c0_49] : memref<3x128x128xbf16, #tpu.memory_space<vmem>>, vector<1x128x128xbf16>
    %66 = vector.shape_cast %65 : vector<1x128x128xbf16> to vector<128x128xbf16>
    %cst_50 = arith.constant dense<0.000000e+00> : vector<34x128xf32>
    %67 = tpu.matmul %64, %66, %cst_50 {dimension_numbers = #tpu.dot_dimension_numbers<[1], [0], [0], [1], [0, 0, 1, 1], [], []>} : vector<34x128xbf16>, vector<128x128xbf16>, vector<34x128xf32> -> vector<34x128xf32>
    %68 = arith.addf %62, %67 : vector<34x128xf32>
    %c1_51 = arith.constant 1 : index
    %c0_52 = arith.constant 0 : index
    %69 = vector.load %arg8[%c1_51, %c0_52] : memref<36x128xf32, #tpu.memory_space<vmem>>, vector<34x128xf32>
    %70 = arith.truncf %69 : vector<34x128xf32> to vector<34x128xbf16>
    %c1_53 = arith.constant 1 : index
    %c0_54 = arith.constant 0 : index
    %c0_55 = arith.constant 0 : index
    %71 = vector.load %arg3[%c1_53, %c0_54, %c0_55] : memref<3x128x128xbf16, #tpu.memory_space<vmem>>, vector<1x128x128xbf16>
    %72 = vector.shape_cast %71 : vector<1x128x128xbf16> to vector<128x128xbf16>
    %cst_56 = arith.constant dense<0.000000e+00> : vector<34x128xf32>
    %73 = tpu.matmul %70, %72, %cst_56 {dimension_numbers = #tpu.dot_dimension_numbers<[1], [0], [0], [1], [0, 0, 1, 1], [], []>} : vector<34x128xbf16>, vector<128x128xbf16>, vector<34x128xf32> -> vector<34x128xf32>
    %74 = arith.addf %68, %73 : vector<34x128xf32>
    %c2_57 = arith.constant 2 : index
    %c0_58 = arith.constant 0 : index
    %75 = vector.load %arg8[%c2_57, %c0_58] : memref<36x128xf32, #tpu.memory_space<vmem>>, vector<34x128xf32>
    %76 = arith.truncf %75 : vector<34x128xf32> to vector<34x128xbf16>
    %c2_59 = arith.constant 2 : index
    %c0_60 = arith.constant 0 : index
    %c0_61 = arith.constant 0 : index
    %77 = vector.load %arg3[%c2_59, %c0_60, %c0_61] : memref<3x128x128xbf16, #tpu.memory_space<vmem>>, vector<1x128x128xbf16>
    %78 = vector.shape_cast %77 : vector<1x128x128xbf16> to vector<128x128xbf16>
    %cst_62 = arith.constant dense<0.000000e+00> : vector<34x128xf32>
    %79 = tpu.matmul %76, %78, %cst_62 {dimension_numbers = #tpu.dot_dimension_numbers<[1], [0], [0], [1], [0, 0, 1, 1], [], []>} : vector<34x128xbf16>, vector<128x128xbf16>, vector<34x128xf32> -> vector<34x128xf32>
    %80 = arith.addf %74, %79 : vector<34x128xf32>
    %c0_63 = arith.constant 0 : index
    %c0_64 = arith.constant 0 : index
    %81 = vector.load %arg5[%c0_63, %c0_64] : memref<1x128xf32, #tpu.memory_space<vmem>>, vector<1x128xf32>
    %82 = vector.broadcast %81 : vector<1x128xf32> to vector<34x128xf32>
    %83 = arith.addf %80, %82 : vector<34x128xf32>
    %84 = vector.extract_strided_slice %83 {offsets = [0, 0], sizes = [16, 128], strides = [1, 1]} : vector<34x128xf32> to vector<16x128xf32>
    %85 = arith.truncf %84 : vector<16x128xf32> to vector<16x128xbf16>
    %c0_65 = arith.constant 0 : index
    %c0_66 = arith.constant 0 : index
    %c0_67 = arith.constant 0 : index
    %86 = vector.load %arg6[%c0_65, %c0_66, %c0_67] : memref<2x16x128xbf16, #tpu.memory_space<vmem>>, vector<1x16x128xbf16>
    %87 = vector.shape_cast %86 : vector<1x16x128xbf16> to vector<16x128xbf16>
    %88 = vector.shape_cast %85 : vector<16x128xbf16> to vector<1x16x128xbf16>
    tpu.vector_store %arg6[%c0_65, %c0_66, %c0_67], %88 {strides = array<i32>} : memref<2x16x128xbf16, #tpu.memory_space<vmem>>, vector<1x16x128xbf16>,
    %89 = vector.extract_strided_slice %83 {offsets = [18, 0], sizes = [16, 128], strides = [1, 1]} : vector<34x128xf32> to vector<16x128xf32>
    %90 = arith.truncf %89 : vector<16x128xf32> to vector<16x128xbf16>
    %c1_68 = arith.constant 1 : index
    %c0_69 = arith.constant 0 : index
    %c0_70 = arith.constant 0 : index
    %91 = vector.load %arg6[%c1_68, %c0_69, %c0_70] : memref<2x16x128xbf16, #tpu.memory_space<vmem>>, vector<1x16x128xbf16>
    %92 = vector.shape_cast %91 : vector<1x16x128xbf16> to vector<16x128xbf16>
    %93 = vector.shape_cast %90 : vector<16x128xbf16> to vector<1x16x128xbf16>
    tpu.vector_store %arg6[%c1_68, %c0_69, %c0_70], %93 {strides = array<i32>} : memref<2x16x128xbf16, #tpu.memory_space<vmem>>, vector<1x16x128xbf16>,
    return
  }
  func.func @transform_0(%arg0: i32) -> (i32, i32, i32) {
    %c0_i32 = arith.constant 0 : i32
    %c0_i32_0 = arith.constant 0 : i32
    %c0_i32_1 = arith.constant 0 : i32
    return %arg0, %c0_i32, %c0_i32_0 : i32, i32, i32
  }
  func.func @transform_1(%arg0: i32) -> (i32, i32, i32) {
    %c0_i32 = arith.constant 0 : i32
    %c0_i32_0 = arith.constant 0 : i32
    %c0_i32_1 = arith.constant 0 : i32
    %c0_i32_2 = arith.constant 0 : i32
    return %c0_i32, %c0_i32_0, %c0_i32_1 : i32, i32, i32
  }
  func.func @transform_2(%arg0: i32) -> (i32, i32, i32) {
    %c0_i32 = arith.constant 0 : i32
    %c0_i32_0 = arith.constant 0 : i32
    %c0_i32_1 = arith.constant 0 : i32
    %c0_i32_2 = arith.constant 0 : i32
    return %c0_i32, %c0_i32_0, %c0_i32_1 : i32, i32, i32
  }
  func.func @transform_3(%arg0: i32) -> (i32, i32) {
    %c0_i32 = arith.constant 0 : i32
    %c0_i32_0 = arith.constant 0 : i32
    %c0_i32_1 = arith.constant 0 : i32
    return %c0_i32, %c0_i32_0 : i32, i32
  }
  func.func @transform_4(%arg0: i32) -> (i32, i32) {
    %c0_i32 = arith.constant 0 : i32
    %c0_i32_0 = arith.constant 0 : i32
    %c0_i32_1 = arith.constant 0 : i32
    return %c0_i32, %c0_i32_0 : i32, i32
  }
  func.func @transform_5(%arg0: i32) -> (i32, i32, i32) {
    %c0_i32 = arith.constant 0 : i32
    %c0_i32_0 = arith.constant 0 : i32
    %c0_i32_1 = arith.constant 0 : i32
    return %arg0, %c0_i32, %c0_i32_0 : i32, i32, i32
  }
}

</mosaic_0001>

<llo_original>
// kernel: tpu_custom_call.1
$region0: #{tpu_custom_call.1}
  #allocation0 [shape = 'u32[]', space=smem, size = 0x4, offset = 0x4, fixed_abs, tag = 'smem constant byte address 0x4 - core index']
  #allocation1 [shape = 'u32[144,128]{1,0:T(1,128)}', space=vmem, size = 0x12000, scoped, tag = 'internal scratch']
  #allocation2 [shape = 'f32[36,64]{1,0:T(8,128)}', space=vmem, size = 0x5000, scoped, tag = 'scratch operand']
  #allocation3 [shape = 'f32[36,128]{1,0:T(8,128)}', space=vmem, size = 0x5000, scoped, tag = 'scratch operand']
  %s0 = inlined_call_operand.hbm [shape: bf16[2,16,64], index: 0, kind: input, shape index: {}]
  %s1 = inlined_call_operand.hbm [shape: bf16[3,64,128], index: 1, kind: input, shape index: {}]
  %s2 = inlined_call_operand.hbm [shape: bf16[3,128,128], index: 2, kind: input, shape index: {}]
  %s3 = inlined_call_operand.vmem [shape: f32[1,128], index: 3, kind: input, shape index: {}]
  %s4 = inlined_call_operand.vmem [shape: f32[1,128], index: 4, kind: input, shape index: {}]
  %s5 = inlined_call_operand.hbm [shape: bf16[2,16,128], index: 5, kind: output, shape index: {}]
  %s6 = sld [smem:[#allocation0]]
  $region42: #{tpu_custom_call.1} parent=0
    _
  %s8 = ssub.s32 1, %s6
  %s9 = scalar_select 0, %s8, %s6
  $region1: #{tpu_custom_call.1} parent=0
    #allocation4 [shape = 'u8[8192]{0}', space=vmem, size = 0x2000, scoped, tag = 'input window, operand 0, single buffered']
    #allocation5 [shape = 's32[1]{0}', space=sflag, size = 0x4, scoped, tag = 'scoped memory for tpu_custom_call.1']
    #allocation6 [shape = 's32[1]{0}', space=sflag, size = 0x4, scoped, tag = 'scoped memory for tpu_custom_call.1']
    #allocation7 [shape = 'u8[49152]{0}', space=vmem, size = 0xc000, scoped, tag = 'input window, operand 1, single buffered']
    #allocation8 [shape = 's32[1]{0}', space=sflag, size = 0x4, scoped, tag = 'scoped memory for tpu_custom_call.1']
    #allocation9 [shape = 'u8[98304]{0}', space=vmem, size = 0x18000, scoped, tag = 'input window, operand 2, single buffered']
    #allocation10 [shape = 'u8[8192]{0}', space=vmem, size = 0x2000, scoped, tag = 'output window, operand 0, single buffered']
    %10 = vsyncpa [#allocation5], 0
    %11 = vsyncpa [#allocation8], 0
    %12 = vsyncpa [#allocation6], 0
    // Predicated region
    $region2: #{tpu_custom_call.1} parent=1 // pred_check
      _
    $region3: #{tpu_custom_call.1} parent=1 // pred_check_branch
      %14 = sbr.rel (0) target = $region5
    $region4: #{tpu_custom_call.1} parent=1 // pred_region
      %s16 = ssub.s32 256, 256
      %17 = vsyncadd [#allocation5], %s16
      %s18 = sshll.u32 [#allocation4], 4
      %s19 = int_to_ptr.vmem [resolvable:$true] %s18
      %24 = dma.hbm_to_vmem [thread:$0]  %s0, 256, %s19, [#allocation5], 64, 64, 4
    $region5: #{tpu_custom_call.1} parent=1 // pred_fallthru
      _
    // Predicated region
    $region6: #{tpu_custom_call.1} parent=1 // pred_check
      _
    $region7: #{tpu_custom_call.1} parent=1 // pred_check_branch
      %26 = sbr.rel (0) target = $region9
    $region8: #{tpu_custom_call.1} parent=1 // pred_region
      %s28 = ssub.s32 1536, 1536
      %29 = vsyncadd [#allocation8], %s28
      %s30 = sshll.u32 [#allocation7], 4
      %s31 = int_to_ptr.vmem [resolvable:$true] %s30
      %36 = dma.hbm_to_vmem [thread:$0]  %s1, 1536, %s31, [#allocation8], 64, 64, 4
    $region9: #{tpu_custom_call.1} parent=1 // pred_fallthru
      _
    // Predicated region
    $region10: #{tpu_custom_call.1} parent=1 // pred_check
      _
    $region11: #{tpu_custom_call.1} parent=1 // pred_check_branch
      %38 = sbr.rel (0) target = $region13
    $region12: #{tpu_custom_call.1} parent=1 // pred_region
      %s40 = ssub.s32 3072, 3072
      %41 = vsyncadd [#allocation8], %s40
      %s42 = sshll.u32 [#allocation9], 4
      %s43 = int_to_ptr.vmem [resolvable:$true] %s42
      %48 = dma.hbm_to_vmem [thread:$0]  %s2, 3072, %s43, [#allocation8], 64, 64, 4
    $region13: #{tpu_custom_call.1} parent=1 // pred_fallthru
      _
    // Predicated region
    $region14: #{tpu_custom_call.1} parent=1 // pred_check
      _
    $region15: #{tpu_custom_call.1} parent=1 // pred_check_branch
      %50 = sbr.rel (0) target = $region17
    $region16: #{tpu_custom_call.1} parent=1 // pred_region
      _
    $region17: #{tpu_custom_call.1} parent=1 // pred_fallthru
      _
    // Predicated region
    $region18: #{tpu_custom_call.1} parent=1 // pred_check
      _
    $region19: #{tpu_custom_call.1} parent=1 // pred_check_branch
      %52 = sbr.rel (0) target = $region21
    $region20: #{tpu_custom_call.1} parent=1 // pred_region
      _
    $region21: #{tpu_custom_call.1} parent=1 // pred_fallthru
      _
    // Predicated region
    $region22: #{tpu_custom_call.1} parent=1 // pred_check
      _
    $region23: #{tpu_custom_call.1} parent=1 // pred_check_branch
      %54 = sbr.rel (0) target = $region25
    $region24: #{tpu_custom_call.1} parent=1 // pred_region
      %55 = dma.done [#allocation5], 256
    $region25: #{tpu_custom_call.1} parent=1 // pred_fallthru
      _
    // Predicated region
    $region26: #{tpu_custom_call.1} parent=1 // pred_check
      _
    $region27: #{tpu_custom_call.1} parent=1 // pred_check_branch
      %57 = sbr.rel (0) target = $region29
    $region28: #{tpu_custom_call.1} parent=1 // pred_region
      %58 = dma.done [#allocation8], 1536
    $region29: #{tpu_custom_call.1} parent=1 // pred_fallthru
      _
    // Predicated region
    $region30: #{tpu_custom_call.1} parent=1 // pred_check
      _
    $region31: #{tpu_custom_call.1} parent=1 // pred_check_branch
      %60 = sbr.rel (0) target = $region33
    $region32: #{tpu_custom_call.1} parent=1 // pred_region
      %61 = dma.done [#allocation8], 3072
    $region33: #{tpu_custom_call.1} parent=1 // pred_fallthru
      _
    %vm63 = vcmask 516096
    %64 = vst.msk [vmem:[#allocation2] sm:$0x1] %vm63, 0.0
    %65 = vst.msk [vmem:[#allocation2 + $0x11] sm:$0x1] %vm63, 0.0
    %66 = vst.msk [vmem:[#allocation2 + $0x12] sm:$0x1] %vm63, 0.0
    %67 = vst.msk [vmem:[#allocation2 + $0x23] sm:$0x1] %vm63, 0.0
    %68 = vst [vmem:[#allocation3] sm:$0x1] 0.0
    %69 = vst [vmem:[#allocation3 + $0x23] sm:$0x1] 0.0
    %v70 = vld [vmem:[#allocation4] sm:$0xf]
    %v71 = vld [vmem:[#allocation4 + $0x4] sm:$0xf]
    %v72 = vunpack.c.l.bf16 %v70
    %v73 = vunpack.c.l.bf16 %v71
    %vm74 = vcmask 523264
    %75 = vst.msk [vmem:[#allocation2 + $0x1] sm:$0xff] %vm74, %v72
    %76 = vst.msk [vmem:[#allocation2 + $0x9] sm:$0xff] %vm74, %v73
    %s77 = scalar_lea.vmem [#allocation4], 8
    %v78 = vld [vmem:[%s77] sm:$0xf]
    %v79 = vld [vmem:[%s77 + $0x4] sm:$0xf]
    %v80 = vunpack.c.l.bf16 %v78
    %v81 = vunpack.c.l.bf16 %v79
    %82 = vst.msk [vmem:[#allocation2 + $0x13] sm:$0xff] %vm74, %v80
    %83 = vst.msk [vmem:[#allocation2 + $0x1b] sm:$0xff] %vm74, %v81
    %v84 = vld [vmem:[#allocation2] sm:$0xff]
    %v85 = vld [vmem:[#allocation2 + $0x8] sm:$0xff]
    %v86 = vld [vmem:[#allocation2 + $0x10] sm:$0xff]
    %v87 = vld [vmem:[#allocation2 + $0x18] sm:$0xff]
    %v88 = vld [vmem:[#allocation2 + $0x20] sm:$0x3]
    %v89 = vpack.c.bf16 %v85, %v84
    %v90 = vpack.c.bf16 %v87, %v86
    %v91 = vpack.c.bf16 %v88, %v88
    %v92 = vld [vmem:[#allocation7] sm:$0xf]
    %v93 = vld [vmem:[#allocation7 + $0x4] sm:$0xf]
    %v94 = vld [vmem:[#allocation7 + $0x8] sm:$0xf]
    %v95 = vld [vmem:[#allocation7 + $0xc] sm:$0xf]
    %v96 = vld [vmem:[#allocation7 + $0x10] sm:$0xf]
    %v97 = vld [vmem:[#allocation7 + $0x14] sm:$0xf]
    %v98 = vld [vmem:[#allocation7 + $0x18] sm:$0xf]
    %v99 = vld [vmem:[#allocation7 + $0x1c] sm:$0xf]
    %v100 = vld [vmem:[#allocation2 + $0x1] sm:$0xff]
    %v101 = vld [vmem:[#allocation2 + $0x9] sm:$0xff]
    %v102 = vld [vmem:[#allocation2 + $0x11] sm:$0xff]
    %v103 = vld [vmem:[#allocation2 + $0x19] sm:$0xff]
    %v104 = vld [vmem:[#allocation2 + $0x21] sm:$0x3]
    %v105 = vpack.c.bf16 %v101, %v100
    %v106 = vpack.c.bf16 %v103, %v102
    %v107 = vpack.c.bf16 %v104, %v104
    %s108 = scalar_lea.vmem [#allocation7], 32
    %v109 = vld [vmem:[%s108] sm:$0xf]
    %v110 = vld [vmem:[%s108 + $0x4] sm:$0xf]
    %v111 = vld [vmem:[%s108 + $0x8] sm:$0xf]
    %v112 = vld [vmem:[%s108 + $0xc] sm:$0xf]
    %v113 = vld [vmem:[%s108 + $0x10] sm:$0xf]
    %v114 = vld [vmem:[%s108 + $0x14] sm:$0xf]
    %v115 = vld [vmem:[%s108 + $0x18] sm:$0xf]
    %v116 = vld [vmem:[%s108 + $0x1c] sm:$0xf]
    %v125 = vunpack.c.l.b16 %v109
    %v126 = vunpack.c.l.b16 %v110
    %v127 = vunpack.c.l.b16 %v111
    %v128 = vunpack.c.l.b16 %v112
    %v129 = vunpack.c.l.b16 %v113
    %v130 = vunpack.c.l.b16 %v114
    %v131 = vunpack.c.l.b16 %v115
    %v132 = vunpack.c.l.b16 %v116
    %v133 = vpack.c.b16 %v126, %v125
    %v134 = vpack.c.b16 %v128, %v127
    %v135 = vpack.c.b16 %v130, %v129
    %v136 = vpack.c.b16 %v132, %v131
    %v142 = vsel %vm74, %v105, 0
    %v145 = vsel %vm74, %v106, 0
    %v148 = vsel %vm74, %v107, 0
    %150 = vmatprep.subr.bf16.mxu0 0
    %151 = vmatpush1.bf16.msra.mxu0 %v133
    %152 = vmatprep.subr.bf16.mxu0 0
    %153 = vmatpush1.bf16.msra.mxu0 %v134
    %154 = vmatprep.subr.bf16.mxu0 0
    %155 = vmatpush1.bf16.msra.mxu0 %v135
    %156 = vmatprep.subr.bf16.mxu0 0
    %157 = vmatpush1.bf16.msra.mxu0 %v136
    %158 = vmatprep.subr.bf16.mxu0 0
    %159 = vmatpush1.bf16.msra.mxu0 0
    %160 = vmatprep.subr.bf16.mxu0 0
    %161 = vmatpush1.bf16.msra.mxu0 0
    %162 = vmatprep.subr.bf16.mxu0 0
    %163 = vmatpush1.bf16.msra.mxu0 0
    %164 = vmatprep.subr.bf16.mxu0 0
    %165 = vmatpush1.bf16.msra.mxu0 0
    %166 = vmatprep.subr.bf16.mxu0 0
    %167 = vmatpush1.bf16.msra.mxu0 0
    %168 = vmatprep.subr.bf16.mxu0 0
    %169 = vmatpush1.bf16.msra.mxu0 0
    %170 = vmatprep.subr.bf16.mxu0 0
    %171 = vmatpush1.bf16.msra.mxu0 0
    %172 = vmatprep.subr.bf16.mxu0 0
    %173 = vmatpush1.bf16.msra.mxu0 0
    %174 = vmatprep.subr.bf16.mxu0 0
    %175 = vmatpush1.bf16.msra.mxu0 0
    %176 = vmatprep.subr.bf16.mxu0 0
    %177 = vmatpush1.bf16.msra.mxu0 0
    %178 = vmatprep.subr.bf16.mxu0 0
    %179 = vmatpush1.bf16.msra.mxu0 0
    %180 = vmatprep.subr.bf16.mxu0 0
    %181 = vmatpush1.bf16.msra.mxu0 0
    %182 = vmatprep.mubr.bf16.mxu0 0
    %183 = vmatmul.mubr.bf16.gmra.mrb[0].mxu0 %v142
    %v184 = vpop.f32.mrb[0].mxu0
    %v185 = vadd.f32 0.0, %v184
    %v186 = vpop.f32.mrb[0].mxu0
    %v187 = vpop.f32.mrb[0].mxu0
    %v188 = vadd.f32 0.0, %v187
    %v189 = vpop.f32.mrb[0].mxu0
    %190 = vmatprep.mubr.bf16.mxu0 0
    %191 = vmatmul.mubr.bf16.gmra.mrb[0].mxu0 %v145
    %v192 = vpop.f32.mrb[0].mxu0
    %v193 = vadd.f32 0.0, %v192
    %v194 = vpop.f32.mrb[0].mxu0
    %v195 = vpop.f32.mrb[0].mxu0
    %v196 = vadd.f32 0.0, %v195
    %v197 = vpop.f32.mrb[0].mxu0
    %198 = vmatprep.mubr.bf16.mxu0 0
    %199 = vmatmul.mubr.bf16.gmra.mrb[0].mxu0 %v148
    %v200 = vpop.f32.mrb[0].mxu0
    %v201 = vadd.f32 0.0, %v200
    %v202 = vpop.f32.mrb[0].mxu0
    %v203 = vpop.f32.mrb[0].mxu0
    %v204 = vpop.f32.mrb[0].mxu0
    %205 = vdwg.mxu0
    %v214 = vunpack.c.l.b16 %v92
    %v215 = vunpack.c.l.b16 %v93
    %v216 = vunpack.c.l.b16 %v94
    %v217 = vunpack.c.l.b16 %v95
    %v218 = vunpack.c.l.b16 %v96
    %v219 = vunpack.c.l.b16 %v97
    %v220 = vunpack.c.l.b16 %v98
    %v221 = vunpack.c.l.b16 %v99
    %v222 = vpack.c.b16 %v215, %v214
    %v223 = vpack.c.b16 %v217, %v216
    %v224 = vpack.c.b16 %v219, %v218
    %v225 = vpack.c.b16 %v221, %v220
    %v231 = vsel %vm74, %v89, 0
    %v234 = vsel %vm74, %v90, 0
    %v237 = vsel %vm74, %v91, 0
    %239 = vmatprep.subr.bf16.mxu0 0
    %240 = vmatpush1.bf16.msra.mxu0 %v222
    %241 = vmatprep.subr.bf16.mxu0 0
    %242 = vmatpush1.bf16.msra.mxu0 %v223
    %243 = vmatprep.subr.bf16.mxu0 0
    %244 = vmatpush1.bf16.msra.mxu0 %v224
    %245 = vmatprep.subr.bf16.mxu0 0
    %246 = vmatpush1.bf16.msra.mxu0 %v225
    %247 = vmatprep.subr.bf16.mxu0 0
    %248 = vmatpush1.bf16.msra.mxu0 0
    %249 = vmatprep.subr.bf16.mxu0 0
    %250 = vmatpush1.bf16.msra.mxu0 0
    %251 = vmatprep.subr.bf16.mxu0 0
    %252 = vmatpush1.bf16.msra.mxu0 0
    %253 = vmatprep.subr.bf16.mxu0 0
    %254 = vmatpush1.bf16.msra.mxu0 0
    %255 = vmatprep.subr.bf16.mxu0 0
    %256 = vmatpush1.bf16.msra.mxu0 0
    %257 = vmatprep.subr.bf16.mxu0 0
    %258 = vmatpush1.bf16.msra.mxu0 0
    %259 = vmatprep.subr.bf16.mxu0 0
    %260 = vmatpush1.bf16.msra.mxu0 0
    %261 = vmatprep.subr.bf16.mxu0 0
    %262 = vmatpush1.bf16.msra.mxu0 0
    %263 = vmatprep.subr.bf16.mxu0 0
    %264 = vmatpush1.bf16.msra.mxu0 0
    %265 = vmatprep.subr.bf16.mxu0 0
    %266 = vmatpush1.bf16.msra.mxu0 0
    %267 = vmatprep.subr.bf16.mxu0 0
    %268 = vmatpush1.bf16.msra.mxu0 0
    %269 = vmatprep.subr.bf16.mxu0 0
    %270 = vmatpush1.bf16.msra.mxu0 0
    %271 = vmatprep.mubr.bf16.mxu0 0
    %272 = vmatmul.mubr.bf16.gmra.mrb[0].mxu0 %v231
    %v273 = vpop.f32.mrb[0].mxu0
    %v274 = vadd.f32 %v185, %v273
    %v275 = vpop.f32.mrb[0].mxu0
    %v276 = vpop.f32.mrb[0].mxu0
    %v277 = vadd.f32 %v188, %v276
    %v278 = vpop.f32.mrb[0].mxu0
    %279 = vmatprep.mubr.bf16.mxu0 0
    %280 = vmatmul.mubr.bf16.gmra.mrb[0].mxu0 %v234
    %v281 = vpop.f32.mrb[0].mxu0
    %v282 = vadd.f32 %v193, %v281
    %v283 = vpop.f32.mrb[0].mxu0
    %v284 = vpop.f32.mrb[0].mxu0
    %v285 = vadd.f32 %v196, %v284
    %v286 = vpop.f32.mrb[0].mxu0
    %287 = vmatprep.mubr.bf16.mxu0 0
    %288 = vmatmul.mubr.bf16.gmra.mrb[0].mxu0 %v237
    %v289 = vpop.f32.mrb[0].mxu0
    %v290 = vadd.f32 %v201, %v289
    %v291 = vpop.f32.mrb[0].mxu0
    %v292 = vpop.f32.mrb[0].mxu0
    %v293 = vpop.f32.mrb[0].mxu0
    %294 = vdwg.mxu0
    %v295 = vld [vmem:[#allocation2 + $0x2] sm:$0xff]
    %v296 = vld [vmem:[#allocation2 + $0xa] sm:$0xff]
    %v297 = vld [vmem:[#allocation2 + $0x12] sm:$0xff]
    %v298 = vld [vmem:[#allocation2 + $0x1a] sm:$0xff]
    %v299 = vld [vmem:[#allocation2 + $0x22] sm:$0x3]
    %v300 = vpack.c.bf16 %v296, %v295
    %v301 = vpack.c.bf16 %v298, %v297
    %v302 = vpack.c.bf16 %v299, %v299
    %s303 = scalar_lea.vmem [#allocation7], 64
    %v304 = vld [vmem:[%s303] sm:$0xf]
    %v305 = vld [vmem:[%s303 + $0x4] sm:$0xf]
    %v306 = vld [vmem:[%s303 + $0x8] sm:$0xf]
    %v307 = vld [vmem:[%s303 + $0xc] sm:$0xf]
    %v308 = vld [vmem:[%s303 + $0x10] sm:$0xf]
    %v309 = vld [vmem:[%s303 + $0x14] sm:$0xf]
    %v310 = vld [vmem:[%s303 + $0x18] sm:$0xf]
    %v311 = vld [vmem:[%s303 + $0x1c] sm:$0xf]
    %v320 = vunpack.c.l.b16 %v304
    %v321 = vunpack.c.l.b16 %v305
    %v322 = vunpack.c.l.b16 %v306
    %v323 = vunpack.c.l.b16 %v307
    %v324 = vunpack.c.l.b16 %v308
    %v325 = vunpack.c.l.b16 %v309
    %v326 = vunpack.c.l.b16 %v310
    %v327 = vunpack.c.l.b16 %v311
    %v328 = vpack.c.b16 %v321, %v320
    %v329 = vpack.c.b16 %v323, %v322
    %v330 = vpack.c.b16 %v325, %v324
    %v331 = vpack.c.b16 %v327, %v326
    %v337 = vsel %vm74, %v300, 0
    %v340 = vsel %vm74, %v301, 0
    %v343 = vsel %vm74, %v302, 0
    %345 = vmatprep.subr.bf16.mxu0 0
    %346 = vmatpush1.bf16.msra.mxu0 %v328
    %347 = vmatprep.subr.bf16.mxu0 0
    %348 = vmatpush1.bf16.msra.mxu0 %v329
    %349 = vmatprep.subr.bf16.mxu0 0
    %350 = vmatpush1.bf16.msra.mxu0 %v330
    %351 = vmatprep.subr.bf16.mxu0 0
    %352 = vmatpush1.bf16.msra.mxu0 %v331
    %353 = vmatprep.subr.bf16.mxu0 0
    %354 = vmatpush1.bf16.msra.mxu0 0
    %355 = vmatprep.subr.bf16.mxu0 0
    %356 = vmatpush1.bf16.msra.mxu0 0
    %357 = vmatprep.subr.bf16.mxu0 0
    %358 = vmatpush1.bf16.msra.mxu0 0
    %359 = vmatprep.subr.bf16.mxu0 0
    %360 = vmatpush1.bf16.msra.mxu0 0
    %361 = vmatprep.subr.bf16.mxu0 0
    %362 = vmatpush1.bf16.msra.mxu0 0
    %363 = vmatprep.subr.bf16.mxu0 0
    %364 = vmatpush1.bf16.msra.mxu0 0
    %365 = vmatprep.subr.bf16.mxu0 0
    %366 = vmatpush1.bf16.msra.mxu0 0
    %367 = vmatprep.subr.bf16.mxu0 0
    %368 = vmatpush1.bf16.msra.mxu0 0
    %369 = vmatprep.subr.bf16.mxu0 0
    %370 = vmatpush1.bf16.msra.mxu0 0
    %371 = vmatprep.subr.bf16.mxu0 0
    %372 = vmatpush1.bf16.msra.mxu0 0
    %373 = vmatprep.subr.bf16.mxu0 0
    %374 = vmatpush1.bf16.msra.mxu0 0
    %375 = vmatprep.subr.bf16.mxu0 0
    %376 = vmatpush1.bf16.msra.mxu0 0
    %377 = vmatprep.mubr.bf16.mxu0 0
    %378 = vmatmul.mubr.bf16.gmra.mrb[0].mxu0 %v337
    %v379 = vpop.f32.mrb[0].mxu0
    %v380 = vadd.f32 0.0, %v379
    %v381 = vpop.f32.mrb[0].mxu0
    %v382 = vpop.f32.mrb[0].mxu0
    %v383 = vadd.f32 0.0, %v382
    %v384 = vpop.f32.mrb[0].mxu0
    %385 = vmatprep.mubr.bf16.mxu0 0
    %386 = vmatmul.mubr.bf16.gmra.mrb[0].mxu0 %v340
    %v387 = vpop.f32.mrb[0].mxu0
    %v388 = vadd.f32 0.0, %v387
    %v389 = vpop.f32.mrb[0].mxu0
    %v390 = vpop.f32.mrb[0].mxu0
    %v391 = vadd.f32 0.0, %v390
    %v392 = vpop.f32.mrb[0].mxu0
    %393 = vmatprep.mubr.bf16.mxu0 0
    %394 = vmatmul.mubr.bf16.gmra.mrb[0].mxu0 %v343
    %v395 = vpop.f32.mrb[0].mxu0
    %v396 = vadd.f32 0.0, %v395
    %v397 = vpop.f32.mrb[0].mxu0
    %v398 = vpop.f32.mrb[0].mxu0
    %v399 = vpop.f32.mrb[0].mxu0
    %400 = vdwg.mxu0
    %v401 = vadd.f32 %v274, %v380
    %v402 = vadd.f32 %v277, %v383
    %v403 = vadd.f32 %v282, %v388
    %v404 = vadd.f32 %v285, %v391
    %v405 = vadd.f32 %v290, %v396
    %v406 = vlaneseq
    %v407 = vshrl.u32 %v406, 7
    %v408 = vadd.s32 %v407, 8
    %v409 = vadd.s32 %v407, 16
    %v410 = vadd.s32 %v407, 24
    %v411 = vadd.s32 %v407, 32
    %vm412 = vcmp.lt.s32.totalorder %v407, 0
    %v413 = vsub.s32 0, %v407
    %v414 = vsel %vm412, %v413, %v407
    %v415 = vmul.u32.u64.compose %v414, 3817748708
    %v416 = vextract.low.u32 %v415
    %v417 = vextract.high.u32 %v415
    %v418 = vshrl.u32 %v417, 4
    %v419 = vmul.u32 %v418, 18
    %v420 = vsub.s32 %v414, %v419
    %v421 = vsub.s32 0, %v420
    %v422 = vsel %vm412, %v421, %v420
    %vm423 = vcmp.lt.s32.totalorder %v408, 0
    %v424 = vsub.s32 0, %v408
    %v425 = vsel %vm423, %v424, %v408
    %v426 = vmul.u32.u64.compose %v425, 3817748708
    %v427 = vextract.low.u32 %v426
    %v428 = vextract.high.u32 %v426
    %v429 = vshrl.u32 %v428, 4
    %v430 = vmul.u32 %v429, 18
    %v431 = vsub.s32 %v425, %v430
    %v432 = vsub.s32 0, %v431
    %v433 = vsel %vm423, %v432, %v431
    %vm434 = vcmp.lt.s32.totalorder %v409, 0
    %v435 = vsub.s32 0, %v409
    %v436 = vsel %vm434, %v435, %v409
    %v437 = vmul.u32.u64.compose %v436, 3817748708
    %v438 = vextract.low.u32 %v437
    %v439 = vextract.high.u32 %v437
    %v440 = vshrl.u32 %v439, 4
    %v441 = vmul.u32 %v440, 18
    %v442 = vsub.s32 %v436, %v441
    %v443 = vsub.s32 0, %v442
    %v444 = vsel %vm434, %v443, %v442
    %vm445 = vcmp.lt.s32.totalorder %v410, 0
    %v446 = vsub.s32 0, %v410
    %v447 = vsel %vm445, %v446, %v410
    %v448 = vmul.u32.u64.compose %v447, 3817748708
    %v449 = vextract.low.u32 %v448
    %v450 = vextract.high.u32 %v448
    %v451 = vshrl.u32 %v450, 4
    %v452 = vmul.u32 %v451, 18
    %v453 = vsub.s32 %v447, %v452
    %v454 = vsub.s32 0, %v453
    %v455 = vsel %vm445, %v454, %v453
    %vm456 = vcmp.lt.s32.totalorder %v411, 0
    %v457 = vsub.s32 0, %v411
    %v458 = vsel %vm456, %v457, %v411
    %v459 = vmul.u32.u64.compose %v458, 3817748708
    %v460 = vextract.low.u32 %v459
    %v461 = vextract.high.u32 %v459
    %v462 = vshrl.u32 %v461, 4
    %v463 = vmul.u32 %v462, 18
    %v464 = vsub.s32 %v458, %v463
    %v465 = vsub.s32 0, %v464
    %v466 = vsel %vm456, %v465, %v464
    %vm467 = vcmp.ne.s32.totalorder %v422, 0
    %vm468 = vcmp.ne.s32.totalorder %v433, 0
    %vm469 = vcmp.ne.s32.totalorder %v444, 0
    %vm470 = vcmp.ne.s32.totalorder %v455, 0
    %vm471 = vcmp.ne.s32.totalorder %v466, 0
    %vm472 = vcmp.lt.s32.totalorder %v422, 0
    %vm473 = vcmp.lt.s32.totalorder %v433, 0
    %vm474 = vcmp.lt.s32.totalorder %v444, 0
    %vm475 = vcmp.lt.s32.totalorder %v455, 0
    %vm476 = vcmp.lt.s32.totalorder %v466, 0
    %vm477 = vmand %vm472, %vm467
    %vm478 = vmand %vm473, %vm468
    %vm479 = vmand %vm474, %vm469
    %vm480 = vmand %vm475, %vm470
    %vm481 = vmand %vm476, %vm471
    %v482 = vadd.s32 %v422, 18
    %v483 = vadd.s32 %v433, 18
    %v484 = vadd.s32 %v444, 18
    %v485 = vadd.s32 %v455, 18
    %v486 = vadd.s32 %v466, 18
    %v487 = vsel %vm477, %v482, %v422
    %v488 = vsel %vm478, %v483, %v433
    %v489 = vsel %vm479, %v484, %v444
    %v490 = vsel %vm480, %v485, %v455
    %v491 = vsel %vm481, %v486, %v466
    %vm492 = vcmp.lt.s32.totalorder %v487, 16
    %vm493 = vcmp.lt.s32.totalorder %v488, 16
    %vm494 = vcmp.lt.s32.totalorder %v489, 16
    %vm495 = vcmp.lt.s32.totalorder %v490, 16
    %vm496 = vcmp.lt.s32.totalorder %v491, 16
    %v497 = vld [vmem:[%s3] sm:$0x1]
    %v499 = vlaneseq
    %v500 = vshrl.u32 %v499, 7
    %v501 = vsub.s32 0, %v500
    %v502 = vrot.slane %v497, %v501
    %v504 = vadd.f32 %v401, %v502
    %v505 = vadd.f32 %v402, %v502
    %v506 = vadd.f32 %v403, %v502
    %v507 = vadd.f32 %v404, %v502
    %v508 = vadd.f32 %v405, %v502
    %v509 = vmax.f32 %v504, 0.0
    %v510 = vmax.f32 %v505, 0.0
    %v511 = vmax.f32 %v506, 0.0
    %v512 = vmax.f32 %v507, 0.0
    %v513 = vmax.f32 %v508, 0.0
    %v514 = vsel %vm492, %v509, 0.0
    %v515 = vsel %vm493, %v510, 0.0
    %v516 = vsel %vm494, %v511, 0.0
    %v517 = vsel %vm495, %v512, 0.0
    %v518 = vsel %vm496, %v513, 0.0
    %519 = vst [vmem:[#allocation3 + $0x1] sm:$0xff] %v514
    %520 = vst [vmem:[#allocation3 + $0x9] sm:$0xff] %v515
    %521 = vst [vmem:[#allocation3 + $0x11] sm:$0xff] %v516
    %522 = vst [vmem:[#allocation3 + $0x19] sm:$0xff] %v517
    %523 = vst [vmem:[#allocation3 + $0x21] sm:$0x3] %v518
    %v524 = vld [vmem:[#allocation3] sm:$0xff]
    %v525 = vld [vmem:[#allocation3 + $0x8] sm:$0xff]
    %v526 = vld [vmem:[#allocation3 + $0x10] sm:$0xff]
    %v527 = vld [vmem:[#allocation3 + $0x18] sm:$0xff]
    %v528 = vld [vmem:[#allocation3 + $0x20] sm:$0x3]
    %v529 = vpack.c.bf16 %v525, %v524
    %v530 = vpack.c.bf16 %v527, %v526
    %v531 = vpack.c.bf16 %v528, %v528
    %v532 = vld [vmem:[#allocation9] sm:$0xf]
    %v533 = vld [vmem:[#allocation9 + $0x4] sm:$0xf]
    %v534 = vld [vmem:[#allocation9 + $0x8] sm:$0xf]
    %v535 = vld [vmem:[#allocation9 + $0xc] sm:$0xf]
    %v536 = vld [vmem:[#allocation9 + $0x10] sm:$0xf]
    %v537 = vld [vmem:[#allocation9 + $0x14] sm:$0xf]
    %v538 = vld [vmem:[#allocation9 + $0x18] sm:$0xf]
    %v539 = vld [vmem:[#allocation9 + $0x1c] sm:$0xf]
    %v540 = vld [vmem:[#allocation9 + $0x20] sm:$0xf]
    %v541 = vld [vmem:[#allocation9 + $0x24] sm:$0xf]
    %v542 = vld [vmem:[#allocation9 + $0x28] sm:$0xf]
    %v543 = vld [vmem:[#allocation9 + $0x2c] sm:$0xf]
    %v544 = vld [vmem:[#allocation9 + $0x30] sm:$0xf]
    %v545 = vld [vmem:[#allocation9 + $0x34] sm:$0xf]
    %v546 = vld [vmem:[#allocation9 + $0x38] sm:$0xf]
    %v547 = vld [vmem:[#allocation9 + $0x3c] sm:$0xf]
    %v548 = vld [vmem:[#allocation3 + $0x1] sm:$0xff]
    %v549 = vld [vmem:[#allocation3 + $0x9] sm:$0xff]
    %v550 = vld [vmem:[#allocation3 + $0x11] sm:$0xff]
    %v551 = vld [vmem:[#allocation3 + $0x19] sm:$0xff]
    %v552 = vld [vmem:[#allocation3 + $0x21] sm:$0x3]
    %v553 = vpack.c.bf16 %v549, %v548
    %v554 = vpack.c.bf16 %v551, %v550
    %v555 = vpack.c.bf16 %v552, %v552
    %s556 = scalar_lea.vmem [#allocation9], 64
    %v557 = vld [vmem:[%s556] sm:$0xf]
    %v558 = vld [vmem:[%s556 + $0x4] sm:$0xf]
    %v559 = vld [vmem:[%s556 + $0x8] sm:$0xf]
    %v560 = vld [vmem:[%s556 + $0xc] sm:$0xf]
    %v561 = vld [vmem:[%s556 + $0x10] sm:$0xf]
    %v562 = vld [vmem:[%s556 + $0x14] sm:$0xf]
    %v563 = vld [vmem:[%s556 + $0x18] sm:$0xf]
    %v564 = vld [vmem:[%s556 + $0x1c] sm:$0xf]
    %v565 = vld [vmem:[%s556 + $0x20] sm:$0xf]
    %v566 = vld [vmem:[%s556 + $0x24] sm:$0xf]
    %v567 = vld [vmem:[%s556 + $0x28] sm:$0xf]
    %v568 = vld [vmem:[%s556 + $0x2c] sm:$0xf]
    %v569 = vld [vmem:[%s556 + $0x30] sm:$0xf]
    %v570 = vld [vmem:[%s556 + $0x34] sm:$0xf]
    %v571 = vld [vmem:[%s556 + $0x38] sm:$0xf]
    %v572 = vld [vmem:[%s556 + $0x3c] sm:$0xf]
    %v589 = vunpack.c.l.b16 %v557
    %v590 = vunpack.c.l.b16 %v558
    %v591 = vunpack.c.l.b16 %v559
    %v592 = vunpack.c.l.b16 %v560
    %v593 = vunpack.c.l.b16 %v561
    %v594 = vunpack.c.l.b16 %v562
    %v595 = vunpack.c.l.b16 %v563
    %v596 = vunpack.c.l.b16 %v564
    %v597 = vunpack.c.l.b16 %v565
    %v598 = vunpack.c.l.b16 %v566
    %v599 = vunpack.c.l.b16 %v567
    %v600 = vunpack.c.l.b16 %v568
    %v601 = vunpack.c.l.b16 %v569
    %v602 = vunpack.c.l.b16 %v570
    %v603 = vunpack.c.l.b16 %v571
    %v604 = vunpack.c.l.b16 %v572
    %v605 = vpack.c.b16 %v590, %v589
    %v606 = vpack.c.b16 %v592, %v591
    %v607 = vpack.c.b16 %v594, %v593
    %v608 = vpack.c.b16 %v596, %v595
    %v609 = vpack.c.b16 %v598, %v597
    %v610 = vpack.c.b16 %v600, %v599
    %v611 = vpack.c.b16 %v602, %v601
    %v612 = vpack.c.b16 %v604, %v603
    %621 = vmatprep.subr.bf16.mxu0 0
    %622 = vmatpush1.bf16.msra.mxu0 %v605
    %623 = vmatprep.subr.bf16.mxu0 0
    %624 = vmatpush1.bf16.msra.mxu0 %v606
    %625 = vmatprep.subr.bf16.mxu0 0
    %626 = vmatpush1.bf16.msra.mxu0 %v607
    %627 = vmatprep.subr.bf16.mxu0 0
    %628 = vmatpush1.bf16.msra.mxu0 %v608
    %629 = vmatprep.subr.bf16.mxu0 0
    %630 = vmatpush1.bf16.msra.mxu0 %v609
    %631 = vmatprep.subr.bf16.mxu0 0
    %632 = vmatpush1.bf16.msra.mxu0 %v610
    %633 = vmatprep.subr.bf16.mxu0 0
    %634 = vmatpush1.bf16.msra.mxu0 %v611
    %635 = vmatprep.subr.bf16.mxu0 0
    %636 = vmatpush1.bf16.msra.mxu0 %v612
    %637 = vmatprep.subr.bf16.mxu0 0
    %638 = vmatpush1.bf16.msra.mxu0 0
    %639 = vmatprep.subr.bf16.mxu0 0
    %640 = vmatpush1.bf16.msra.mxu0 0
    %641 = vmatprep.subr.bf16.mxu0 0
    %642 = vmatpush1.bf16.msra.mxu0 0
    %643 = vmatprep.subr.bf16.mxu0 0
    %644 = vmatpush1.bf16.msra.mxu0 0
    %645 = vmatprep.subr.bf16.mxu0 0
    %646 = vmatpush1.bf16.msra.mxu0 0
    %647 = vmatprep.subr.bf16.mxu0 0
    %648 = vmatpush1.bf16.msra.mxu0 0
    %649 = vmatprep.subr.bf16.mxu0 0
    %650 = vmatpush1.bf16.msra.mxu0 0
    %651 = vmatprep.subr.bf16.mxu0 0
    %652 = vmatpush1.bf16.msra.mxu0 0
    %653 = vmatprep.mubr.bf16.mxu0 0
    %654 = vmatmul.mubr.bf16.gmra.mrb[0].mxu0 %v553
    %v655 = vpop.f32.mrb[0].mxu0
    %v656 = vadd.f32 0.0, %v655
    %v657 = vpop.f32.mrb[0].mxu0
    %v658 = vpop.f32.mrb[0].mxu0
    %v659 = vadd.f32 0.0, %v658
    %v660 = vpop.f32.mrb[0].mxu0
    %661 = vmatprep.mubr.bf16.mxu0 0
    %662 = vmatmul.mubr.bf16.gmra.mrb[0].mxu0 %v554
    %v663 = vpop.f32.mrb[0].mxu0
    %v664 = vadd.f32 0.0, %v663
    %v665 = vpop.f32.mrb[0].mxu0
    %v666 = vpop.f32.mrb[0].mxu0
    %v667 = vadd.f32 0.0, %v666
    %v668 = vpop.f32.mrb[0].mxu0
    %669 = vmatprep.mubr.bf16.mxu0 0
    %670 = vmatmul.mubr.bf16.gmra.mrb[0].mxu0 %v555
    %v671 = vpop.f32.mrb[0].mxu0
    %v672 = vadd.f32 0.0, %v671
    %v673 = vpop.f32.mrb[0].mxu0
    %v674 = vpop.f32.mrb[0].mxu0
    %v675 = vpop.f32.mrb[0].mxu0
    %676 = vdwg.mxu0
    %v693 = vunpack.c.l.b16 %v532
    %v694 = vunpack.c.l.b16 %v533
    %v695 = vunpack.c.l.b16 %v534
    %v696 = vunpack.c.l.b16 %v535
    %v697 = vunpack.c.l.b16 %v536
    %v698 = vunpack.c.l.b16 %v537
    %v699 = vunpack.c.l.b16 %v538
    %v700 = vunpack.c.l.b16 %v539
    %v701 = vunpack.c.l.b16 %v540
    %v702 = vunpack.c.l.b16 %v541
    %v703 = vunpack.c.l.b16 %v542
    %v704 = vunpack.c.l.b16 %v543
    %v705 = vunpack.c.l.b16 %v544
    %v706 = vunpack.c.l.b16 %v545
    %v707 = vunpack.c.l.b16 %v546
    %v708 = vunpack.c.l.b16 %v547
    %v709 = vpack.c.b16 %v694, %v693
    %v710 = vpack.c.b16 %v696, %v695
    %v711 = vpack.c.b16 %v698, %v697
    %v712 = vpack.c.b16 %v700, %v699
    %v713 = vpack.c.b16 %v702, %v701
    %v714 = vpack.c.b16 %v704, %v703
    %v715 = vpack.c.b16 %v706, %v705
    %v716 = vpack.c.b16 %v708, %v707
    %725 = vmatprep.subr.bf16.mxu0 0
    %726 = vmatpush1.bf16.msra.mxu0 %v709
    %727 = vmatprep.subr.bf16.mxu0 0
    %728 = vmatpush1.bf16.msra.mxu0 %v710
    %729 = vmatprep.subr.bf16.mxu0 0
    %730 = vmatpush1.bf16.msra.mxu0 %v711
    %731 = vmatprep.subr.bf16.mxu0 0
    %732 = vmatpush1.bf16.msra.mxu0 %v712
    %733 = vmatprep.subr.bf16.mxu0 0
    %734 = vmatpush1.bf16.msra.mxu0 %v713
    %735 = vmatprep.subr.bf16.mxu0 0
    %736 = vmatpush1.bf16.msra.mxu0 %v714
    %737 = vmatprep.subr.bf16.mxu0 0
    %738 = vmatpush1.bf16.msra.mxu0 %v715
    %739 = vmatprep.subr.bf16.mxu0 0
    %740 = vmatpush1.bf16.msra.mxu0 %v716
    %741 = vmatprep.subr.bf16.mxu0 0
    %742 = vmatpush1.bf16.msra.mxu0 0
    %743 = vmatprep.subr.bf16.mxu0 0
    %744 = vmatpush1.bf16.msra.mxu0 0
    %745 = vmatprep.subr.bf16.mxu0 0
    %746 = vmatpush1.bf16.msra.mxu0 0
    %747 = vmatprep.subr.bf16.mxu0 0
    %748 = vmatpush1.bf16.msra.mxu0 0
    %749 = vmatprep.subr.bf16.mxu0 0
    %750 = vmatpush1.bf16.msra.mxu0 0
    %751 = vmatprep.subr.bf16.mxu0 0
    %752 = vmatpush1.bf16.msra.mxu0 0
    %753 = vmatprep.subr.bf16.mxu0 0
    %754 = vmatpush1.bf16.msra.mxu0 0
    %755 = vmatprep.subr.bf16.mxu0 0
    %756 = vmatpush1.bf16.msra.mxu0 0
    %757 = vmatprep.mubr.bf16.mxu0 0
    %758 = vmatmul.mubr.bf16.gmra.mrb[0].mxu0 %v529
    %v759 = vpop.f32.mrb[0].mxu0
    %v760 = vadd.f32 %v656, %v759
    %v761 = vpop.f32.mrb[0].mxu0
    %v762 = vpop.f32.mrb[0].mxu0
    %v763 = vadd.f32 %v659, %v762
    %v764 = vpop.f32.mrb[0].mxu0
    %765 = vmatprep.mubr.bf16.mxu0 0
    %766 = vmatmul.mubr.bf16.gmra.mrb[0].mxu0 %v530
    %v767 = vpop.f32.mrb[0].mxu0
    %v768 = vadd.f32 %v664, %v767
    %v769 = vpop.f32.mrb[0].mxu0
    %v770 = vpop.f32.mrb[0].mxu0
    %v771 = vadd.f32 %v667, %v770
    %v772 = vpop.f32.mrb[0].mxu0
    %773 = vmatprep.mubr.bf16.mxu0 0
    %774 = vmatmul.mubr.bf16.gmra.mrb[0].mxu0 %v531
    %v775 = vpop.f32.mrb[0].mxu0
    %v776 = vadd.f32 %v672, %v775
    %v777 = vpop.f32.mrb[0].mxu0
    %v778 = vpop.f32.mrb[0].mxu0
    %v779 = vpop.f32.mrb[0].mxu0
    %780 = vdwg.mxu0
    %v781 = vld [vmem:[#allocation3 + $0x2] sm:$0xff]
    %v782 = vld [vmem:[#allocation3 + $0xa] sm:$0xff]
    %v783 = vld [vmem:[#allocation3 + $0x12] sm:$0xff]
    %v784 = vld [vmem:[#allocation3 + $0x1a] sm:$0xff]
    %v785 = vld [vmem:[#allocation3 + $0x22] sm:$0x3]
    %v786 = vpack.c.bf16 %v782, %v781
    %v787 = vpack.c.bf16 %v784, %v783
    %v788 = vpack.c.bf16 %v785, %v785
    %s789 = scalar_lea.vmem [#allocation9], 128
    %v790 = vld [vmem:[%s789] sm:$0xf]
    %v791 = vld [vmem:[%s789 + $0x4] sm:$0xf]
    %v792 = vld [vmem:[%s789 + $0x8] sm:$0xf]
    %v793 = vld [vmem:[%s789 + $0xc] sm:$0xf]
    %v794 = vld [vmem:[%s789 + $0x10] sm:$0xf]
    %v795 = vld [vmem:[%s789 + $0x14] sm:$0xf]
    %v796 = vld [vmem:[%s789 + $0x18] sm:$0xf]
    %v797 = vld [vmem:[%s789 + $0x1c] sm:$0xf]
    %v798 = vld [vmem:[%s789 + $0x20] sm:$0xf]
    %v799 = vld [vmem:[%s789 + $0x24] sm:$0xf]
    %v800 = vld [vmem:[%s789 + $0x28] sm:$0xf]
    %v801 = vld [vmem:[%s789 + $0x2c] sm:$0xf]
    %v802 = vld [vmem:[%s789 + $0x30] sm:$0xf]
    %v803 = vld [vmem:[%s789 + $0x34] sm:$0xf]
    %v804 = vld [vmem:[%s789 + $0x38] sm:$0xf]
    %v805 = vld [vmem:[%s789 + $0x3c] sm:$0xf]
    %v822 = vunpack.c.l.b16 %v790
    %v823 = vunpack.c.l.b16 %v791
    %v824 = vunpack.c.l.b16 %v792
    %v825 = vunpack.c.l.b16 %v793
    %v826 = vunpack.c.l.b16 %v794
    %v827 = vunpack.c.l.b16 %v795
    %v828 = vunpack.c.l.b16 %v796
    %v829 = vunpack.c.l.b16 %v797
    %v830 = vunpack.c.l.b16 %v798
    %v831 = vunpack.c.l.b16 %v799
    %v832 = vunpack.c.l.b16 %v800
    %v833 = vunpack.c.l.b16 %v801
    %v834 = vunpack.c.l.b16 %v802
    %v835 = vunpack.c.l.b16 %v803
    %v836 = vunpack.c.l.b16 %v804
    %v837 = vunpack.c.l.b16 %v805
    %v838 = vpack.c.b16 %v823, %v822
    %v839 = vpack.c.b16 %v825, %v824
    %v840 = vpack.c.b16 %v827, %v826
    %v841 = vpack.c.b16 %v829, %v828
    %v842 = vpack.c.b16 %v831, %v830
    %v843 = vpack.c.b16 %v833, %v832
    %v844 = vpack.c.b16 %v835, %v834
    %v845 = vpack.c.b16 %v837, %v836
    %854 = vmatprep.subr.bf16.mxu0 0
    %855 = vmatpush1.bf16.msra.mxu0 %v838
    %856 = vmatprep.subr.bf16.mxu0 0
    %857 = vmatpush1.bf16.msra.mxu0 %v839
    %858 = vmatprep.subr.bf16.mxu0 0
    %859 = vmatpush1.bf16.msra.mxu0 %v840
    %860 = vmatprep.subr.bf16.mxu0 0
    %861 = vmatpush1.bf16.msra.mxu0 %v841
    %862 = vmatprep.subr.bf16.mxu0 0
    %863 = vmatpush1.bf16.msra.mxu0 %v842
    %864 = vmatprep.subr.bf16.mxu0 0
    %865 = vmatpush1.bf16.msra.mxu0 %v843
    %866 = vmatprep.subr.bf16.mxu0 0
    %867 = vmatpush1.bf16.msra.mxu0 %v844
    %868 = vmatprep.subr.bf16.mxu0 0
    %869 = vmatpush1.bf16.msra.mxu0 %v845
    %870 = vmatprep.subr.bf16.mxu0 0
    %871 = vmatpush1.bf16.msra.mxu0 0
    %872 = vmatprep.subr.bf16.mxu0 0
    %873 = vmatpush1.bf16.msra.mxu0 0
    %874 = vmatprep.subr.bf16.mxu0 0
    %875 = vmatpush1.bf16.msra.mxu0 0
    %876 = vmatprep.subr.bf16.mxu0 0
    %877 = vmatpush1.bf16.msra.mxu0 0
    %878 = vmatprep.subr.bf16.mxu0 0
    %879 = vmatpush1.bf16.msra.mxu0 0
    %880 = vmatprep.subr.bf16.mxu0 0
    %881 = vmatpush1.bf16.msra.mxu0 0
    %882 = vmatprep.subr.bf16.mxu0 0
    %883 = vmatpush1.bf16.msra.mxu0 0
    %884 = vmatprep.subr.bf16.mxu0 0
    %885 = vmatpush1.bf16.msra.mxu0 0
    %886 = vmatprep.mubr.bf16.mxu0 0
    %887 = vmatmul.mubr.bf16.gmra.mrb[0].mxu0 %v786
    %v888 = vpop.f32.mrb[0].mxu0
    %v889 = vadd.f32 0.0, %v888
    %v890 = vpop.f32.mrb[0].mxu0
    %v891 = vpop.f32.mrb[0].mxu0
    %v892 = vadd.f32 0.0, %v891
    %v893 = vpop.f32.mrb[0].mxu0
    %894 = vmatprep.mubr.bf16.mxu0 0
    %895 = vmatmul.mubr.bf16.gmra.mrb[0].mxu0 %v787
    %v896 = vpop.f32.mrb[0].mxu0
    %v897 = vadd.f32 0.0, %v896
    %v898 = vpop.f32.mrb[0].mxu0
    %v899 = vpop.f32.mrb[0].mxu0
    %v900 = vadd.f32 0.0, %v899
    %v901 = vpop.f32.mrb[0].mxu0
    %902 = vmatprep.mubr.bf16.mxu0 0
    %903 = vmatmul.mubr.bf16.gmra.mrb[0].mxu0 %v788
    %v904 = vpop.f32.mrb[0].mxu0
    %v905 = vadd.f32 0.0, %v904
    %v906 = vpop.f32.mrb[0].mxu0
    %v907 = vpop.f32.mrb[0].mxu0
    %v908 = vpop.f32.mrb[0].mxu0
    %909 = vdwg.mxu0
    %v910 = vadd.f32 %v760, %v889
    %v911 = vadd.f32 %v763, %v892
    %v912 = vadd.f32 %v768, %v897
    %v913 = vadd.f32 %v771, %v900
    %v914 = vadd.f32 %v776, %v905
    %v915 = vld [vmem:[%s4] sm:$0x1]
    %v917 = vlaneseq
    %v918 = vshrl.u32 %v917, 7
    %v919 = vsub.s32 0, %v918
    %v920 = vrot.slane %v915, %v919
    %v922 = vadd.f32 %v910, %v920
    %v923 = vadd.f32 %v911, %v920
    %v924 = vadd.f32 %v912, %v920
    %v925 = vadd.f32 %v913, %v920
    %v926 = vadd.f32 %v914, %v920
    %v927 = vpack.c.bf16 %v923, %v922
    %v929 = vunpack.c.l.b16 %v927
    %v930 = vunpack.c.h.b16 %v927
    %v931 = vpack.c.b16 %v929, %v929
    %v932 = vpack.c.b16 %v930, %v930
    %935 = vst [vmem:[#allocation10] sm:$0xf] %v931
    %936 = vst [vmem:[#allocation10 + $0x4] sm:$0xf] %v932
    %v937 = vpack.c.bf16 %v925, %v924
    %v938 = vpack.c.bf16 %v926, %v926
    %v941 = vunpack.c.l.b16 %v937
    %v942 = vunpack.c.h.b16 %v937
    %v943 = vunpack.c.l.b16 %v938
    %v944 = vpack.c.b16 %v941, %v941
    %v945 = vpack.c.b16 %v942, %v942
    %v946 = vpack.c.b16 %v943, %v943
    %vm947 = vcmask 1042432
    %vm948 = vcmask 1046532
    %vm949 = vmor %vm947, %vm948
    %v950 = vrot.slane %v944, 5
    %v951 = vrot.slane %v950, 4
    %v952 = vrot.slane %v945, 5
    %v953 = vsel %vm949, %v951, %v952
    %v954 = vrot.slane %v952, 4
    %v955 = vrot.slane %v946, 5
    %v956 = vsel %vm949, %v954, %v955
    %s959 = scalar_lea.vmem [#allocation10], 8
    %960 = vst [vmem:[%s959] sm:$0xf] %v953
    %961 = vst [vmem:[%s959 + $0x4] sm:$0xf] %v956
    // Predicated region
    $region34: #{tpu_custom_call.1} parent=1 // pred_check
      _
    $region35: #{tpu_custom_call.1} parent=1 // pred_check_branch
      %963 = sbr.rel (0) target = $region37
    $region36: #{tpu_custom_call.1} parent=1 // pred_region
      %s965 = ssub.s32 256, 256
      %966 = vsyncadd [#allocation6], %s965
      %s967 = sshll.u32 [#allocation10], 4
      %s968 = int_to_ptr.vmem [resolvable:$true] %s967
      %973 = dma.vmem_to_hbm [thread:$0]  %s968, 256, %s5, [#allocation6], 64, 64, 4
    $region37: #{tpu_custom_call.1} parent=1 // pred_fallthru
      _
    // Predicated region
    $region38: #{tpu_custom_call.1} parent=1 // pred_check
      _
    $region39: #{tpu_custom_call.1} parent=1 // pred_check_branch
      %975 = sbr.rel (0) target = $region41
    $region40: #{tpu_custom_call.1} parent=1 // pred_region
      %976 = dma.done [#allocation6], 256
    $region41: #{tpu_custom_call.1} parent=1 // pred_fallthru
      _
    %977 = vsyncpa [#allocation5], 1
    %978 = vsyncpa [#allocation8], 1
    %979 = vsyncpa [#allocation6], 1

</llo_original>
